<compile_context>
chip_gen: v5e
topology: v5e:2x2
jax: 0.10.0
libtpu: 0.0.40
codegen_flags: <defaults>
</compile_context>

<pallas_src>
import jax
import jax.numpy as jnp
from jax.experimental import pallas as pl
from jax.experimental.pallas import tpu as pltpu

_LANE = 128


def _round_up(x, m):
    return (x + m - 1) // m * m


def _sublane(dtype):
    # sublane packing of the second-minor vreg dim per element width
    return {1: 32, 2: 16, 4: 8}[jnp.dtype(dtype).itemsize]


def _vmem_capacity_bytes():
    try:
        return int(pltpu.get_tpu_info().vmem_capacity_bytes)
    except Exception:
        return 128 * 1024 * 1024  # v5e/v6e physical; v7x reports its own 64 MiB


def server_mlp_kernel(x0_ref, x1_ref, w1_ref, b1_ref, w2_ref, b2_ref, o_ref):
    h0 = x0_ref.shape[-1]          # static, sublane-aligned split point
    cdt = w1_ref.dtype             # compute dtype (matmul operands)
    # In-kernel activation cast (VPU, hidden under MXU slack) keeps the HBM
    # activation stream at its original width.
    a0 = x0_ref[...].astype(cdt)
    a1 = x1_ref[...].astype(cdt)
    # hidden = ReLU( cat(x0, x1, dim=1) @ W1 + b1 ) via split matmul against
    # static sublane slices of the resident W1 tile; f32 accumulation.
    h = jnp.dot(a0, w1_ref[:h0, :], preferred_element_type=jnp.float32)
    h = h + jnp.dot(a1, w1_ref[h0:, :], preferred_element_type=jnp.float32)
    h = jnp.maximum(h + b1_ref[...], 0.0)           # bias + ReLU in f32 (VPU)
    # logits = hidden @ W2 + b2 (operands in compute dtype, f32 accumulate)
    o = jnp.dot(h.astype(cdt), w2_ref[...], preferred_element_type=jnp.float32)
    o_ref[...] = (o + b2_ref[...]).astype(o_ref.dtype)


def prepare_server_params(params, *, compute_dtype=None):
    """Cast / lane-pad the server-head parameters ONCE; reuse every forward."""
    w1, b1, w2, b2 = (jnp.asarray(p) for p in params)
    if compute_dtype is None:
        compute_dtype = w1.dtype
    compute_dtype = jnp.dtype(compute_dtype)
    h_cat, d = w1.shape
    d2, c = w2.shape
    assert d2 == d, "W2 input dim must match W1 output dim"
    c_pad = _round_up(c, _LANE)                     # lane-dense output stores
    w1c = w1.astype(compute_dtype)
    w2c = w2.astype(compute_dtype)
    b1r = b1.astype(jnp.float32).reshape(1, d)      # biases stay f32
    b2r = b2.astype(jnp.float32).reshape(1, c)
    if c_pad != c:
        w2c = jnp.pad(w2c, ((0, 0), (0, c_pad - c)))
        b2r = jnp.pad(b2r, ((0, 0), (0, c_pad - c)))
    return {"w1": w1c, "b1": b1r, "w2": w2c, "b2": b2r,
            "Hcat": h_cat, "D": d, "C": c, "C_pad": c_pad,
            "compute_dtype": compute_dtype}


def server_forward(intermediate_to_server, prepared, cat_dimension=1,
                   *, batch_tile=1024, act_buffers=None):
    """Pallas equivalent of Server.forward: cat(inputs, dim=1) -> MLP head."""
    assert cat_dimension == 1, "kernel implements concat along the feature axis"
    x0, x1 = intermediate_to_server
    B, H0 = x0.shape
    Bb, H1 = x1.shape
    assert Bb == B and H0 + H1 == prepared["Hcat"]

    D, C, C_pad = prepared["D"], prepared["C"], prepared["C_pad"]
    cdt = prepared["compute_dtype"]
    w1, b1, w2, b2 = prepared["w1"], prepared["b1"], prepared["w2"], prepared["b2"]

    out_dtype = x0.dtype
    in_itm = jnp.dtype(x0.dtype).itemsize
    out_itm = jnp.dtype(out_dtype).itemsize
    cd_itm = cdt.itemsize

    sub = _sublane(cdt)
    # Tile-aligned split point keeps w1_ref[:H0] / w1_ref[H0:] zero-cost views.
    assert H0 % sub == 0, f"H0={H0} must be a multiple of {sub} for {cdt}"

    # ---- per-generation tile sizing against the VMEM budget -----------------
    vmem_cap = _vmem_capacity_bytes()
    budget = int(0.85 * vmem_cap)          # headroom for compiler scratch
    n_act_buf = 2 if act_buffers is None else int(act_buffers)

    def vmem_need(tb):                      # conservative: double-buffered wgts
        act = n_act_buf * tb * (H0 + H1) * in_itm
        out = 2 * tb * C_pad * out_itm
        hid = tb * D * (4 + cd_itm)         # f32 hidden + compute-dtype recast
        wgt = 2 * (((H0 + H1) * D + D * C_pad) * cd_itm + (D + C_pad) * 4)
        return act + out + hid + wgt

    TB = min(_round_up(batch_tile, sub), _round_up(B, sub))
    if B >= 2 * sub:                        # keep >=2 grid steps for megacore
        TB = min(TB, _round_up(pl.cdiv(B, 2), sub))
    while TB > sub and vmem_need(TB) > budget:
        TB = _round_up(max(TB // 2, sub), sub)
    grid = (pl.cdiv(B, TB),)                # ragged last block masked by Pallas

    vmem_limit = int(min(budget, max(16 * 1024 * 1024, vmem_need(TB) * 5 // 4)))

    cost = pl.CostEstimate(
        flops=2 * B * ((H0 + H1) * D + D * C_pad),
        transcendentals=0,
        bytes_accessed=int((x0.size + x1.size) * in_itm
                           + (w1.size + w2.size) * cd_itm
                           + (b1.size + b2.size) * 4
                           + B * C_pad * out_itm),
    )

    def run(use_pipeline_modes):
        wmode = {"pipeline_mode": pl.Buffered(1)} if use_pipeline_modes else {}
        amode = ({"pipeline_mode": pl.Buffered(n_act_buf)}
                 if (use_pipeline_modes and act_buffers is not None) else {})
        return pl.pallas_call(
            server_mlp_kernel,
            out_shape=jax.ShapeDtypeStruct((B, C_pad), out_dtype),
            grid=grid,
            in_specs=[
                pl.BlockSpec((TB, H0), lambda i: (i, 0), **amode),     # client-0 tile
                pl.BlockSpec((TB, H1), lambda i: (i, 0), **amode),     # client-1 tile
                pl.BlockSpec((H0 + H1, D), lambda i: (0, 0), **wmode),  # W1 resident
                pl.BlockSpec((1, D), lambda i: (0, 0), **wmode),        # b1 resident
                pl.BlockSpec((D, C_pad), lambda i: (0, 0), **wmode),    # W2 resident
                pl.BlockSpec((1, C_pad), lambda i: (0, 0), **wmode),    # b2 resident
            ],
            out_specs=pl.BlockSpec((TB, C_pad), lambda i: (i, 0)),
            compiler_params=pltpu.CompilerParams(
                dimension_semantics=("parallel",),
                vmem_limit_bytes=vmem_limit,
            ),
            cost_estimate=cost,
        )(x0, x1, w1, b1, w2, b2)

    try:
        out_padded = run(True)       # single-buffered resident weights
    except Exception:
        out_padded = run(False)      # pipeline_mode unsupported -> default bufs

    return out_padded[:, :C] if C_pad != C else out_padded


# TODO(synk): server_backward() returns the captured .grad of the client
# intermediates via torch autograd; in JAX obtain it with jax.vjp/jax.grad
# around server_forward outside the kernel, not inside it.
# TODO(synk): train()/eval() toggle server_model mode; the MLP head here is
# stateless w.r.t. mode, so they are no-ops.


if __name__ == "__main__":
    key = jax.random.PRNGKey(0)
    k0, k1, k2, k3, k4, k5 = jax.random.split(key, 6)

    # batch, per-client hidden, server hidden, classes
    B, H, D, C = 64, 32, 32, 8
    x0 = jax.random.normal(k0, (B, H), jnp.float32)   # client-0 intermediate
    x1 = jax.random.normal(k1, (B, H), jnp.float32)   # client-1 intermediate

    # deterministic synthetic server_model parameters (torch-style 1-D biases)
    w1 = jax.random.normal(k2, (2 * H, D), jnp.float32) * 0.1
    b1 = jax.random.normal(k3, (D,), jnp.float32) * 0.1
    w2 = jax.random.normal(k4, (D, C), jnp.float32) * 0.1
    b2 = jax.random.normal(k5, (C,), jnp.float32) * 0.1

    # pure-JAX reference mirroring torch: cat -> Linear -> ReLU -> Linear
    def ref_fwd(a0, a1):
        return jnp.maximum(jnp.concatenate([a0, a1], axis=1) @ w1 + b1, 0.0) @ w2 + b2

    ref = ref_fwd(x0, x1)

    # f32 path (matches torch f32 semantics); weights prepared once, reused.
    prep_f32 = prepare_server_params((w1, b1, w2, b2), compute_dtype=jnp.float32)
    out = server_forward([x0, x1], prep_f32, cat_dimension=1)
    out = jax.block_until_ready(out)
    assert out.shape == (B, C)
    assert jnp.allclose(out, ref, atol=1e-5, rtol=1e-5), "f32 mismatch vs reference"

    # bf16-operand / f32-accumulate path (recommended on v5e/v6e/v7x MXU);
    # activations stay f32 in HBM and are cast inside the kernel.
    prep_bf16 = prepare_server_params((w1, b1, w2, b2), compute_dtype=jnp.bfloat16)
    out_bf16 = server_forward([x0, x1], prep_bf16, cat_dimension=1)
    out_bf16 = jax.block_until_ready(out_bf16)
    assert out_bf16.shape == (B, C)
    assert jnp.allclose(out_bf16, ref, atol=5e-2, rtol=5e-2), "bf16 mismatch vs reference"

    # ragged batch (no wrapper-side padding: Pallas masks the partial block)
    Br = 13
    out_r = server_forward([x0[:Br], x1[:Br]], prep_f32, cat_dimension=1)
    out_r = jax.block_until_ready(out_r)
    assert out_r.shape == (Br, C)
    assert jnp.allclose(out_r, ref_fwd(x0[:Br], x1[:Br]), atol=1e-5, rtol=1e-5), \
        "ragged-batch mismatch vs reference"

    print("KERNEL_OK")
</pallas_src>

<mosaic_0001>
module attributes {stable_mosaic.version = 11 : i64} {
  func.func @server_mlp_kernel(%arg0: i32, %arg1: memref<32x32xf32, #tpu.memory_space<vmem>>, %arg2: memref<32x32xf32, #tpu.memory_space<vmem>>, %arg3: memref<64x32xf32, #tpu.memory_space<vmem>>, %arg4: memref<1x32xf32, #tpu.memory_space<vmem>>, %arg5: memref<32x128xf32, #tpu.memory_space<vmem>>, %arg6: memref<1x128xf32, #tpu.memory_space<vmem>>, %arg7: memref<32x128xf32, #tpu.memory_space<vmem>>) attributes {dimension_semantics = [#tpu.dimension_semantics<parallel>], iteration_bounds = array<i64: 2>, scalar_prefetch = 0 : i64, scratch_operands = 0 : i64, tpu.core_type = #tpu.core_type<tc>, window_params = [{transform_indices = @transform_0, window_bounds = array<i64: 32, 32>}, {transform_indices = @transform_1, window_bounds = array<i64: 32, 32>}, {pipeline_mode = #tpu.pipeline_mode<synchronous>, transform_indices = @transform_2, window_bounds = array<i64: 64, 32>}, {pipeline_mode = #tpu.pipeline_mode<synchronous>, transform_indices = @transform_3, window_bounds = array<i64: 1, 32>}, {pipeline_mode = #tpu.pipeline_mode<synchronous>, transform_indices = @transform_4, window_bounds = array<i64: 32, 128>}, {pipeline_mode = #tpu.pipeline_mode<synchronous>, transform_indices = @transform_5, window_bounds = array<i64: 1, 128>}, {transform_indices = @transform_6, window_bounds = array<i64: 32, 128>}]} {
    %c0 = arith.constant 0 : index
    %c0_0 = arith.constant 0 : index
    %0 = vector.load %arg1[%c0, %c0_0] : memref<32x32xf32, #tpu.memory_space<vmem>>, vector<32x32xf32>
    %c0_1 = arith.constant 0 : index
    %c0_2 = arith.constant 0 : index
    %1 = vector.load %arg2[%c0_1, %c0_2] : memref<32x32xf32, #tpu.memory_space<vmem>>, vector<32x32xf32>
    %c0_3 = arith.constant 0 : index
    %c0_4 = arith.constant 0 : index
    %2 = vector.load %arg3[%c0_3, %c0_4] : memref<64x32xf32, #tpu.memory_space<vmem>>, vector<32x32xf32>
    %cst = arith.constant dense<0.000000e+00> : vector<32x32xf32>
    %3 = tpu.matmul %0, %2, %cst {dimension_numbers = #tpu.dot_dimension_numbers<[1], [0], [0], [1], [0, 0, 1, 1], [], []>} : vector<32x32xf32>, vector<32x32xf32>, vector<32x32xf32> -> vector<32x32xf32>
    %c32 = arith.constant 32 : index
    %c0_5 = arith.constant 0 : index
    %4 = vector.load %arg3[%c32, %c0_5] : memref<64x32xf32, #tpu.memory_space<vmem>>, vector<32x32xf32>
    %cst_6 = arith.constant dense<0.000000e+00> : vector<32x32xf32>
    %5 = tpu.matmul %1, %4, %cst_6 {dimension_numbers = #tpu.dot_dimension_numbers<[1], [0], [0], [1], [0, 0, 1, 1], [], []>} : vector<32x32xf32>, vector<32x32xf32>, vector<32x32xf32> -> vector<32x32xf32>
    %6 = arith.addf %3, %5 : vector<32x32xf32>
    %c0_7 = arith.constant 0 : index
    %c0_8 = arith.constant 0 : index
    %7 = vector.load %arg4[%c0_7, %c0_8] : memref<1x32xf32, #tpu.memory_space<vmem>>, vector<1x32xf32>
    %8 = vector.broadcast %7 : vector<1x32xf32> to vector<32x32xf32>
    %9 = arith.addf %6, %8 : vector<32x32xf32>
    %cst_9 = arith.constant 0.000000e+00 : f32
    %10 = vector.broadcast %cst_9 : f32 to vector<32x32xf32>
    %11 = arith.maximumf %9, %10 : vector<32x32xf32>
    %c0_10 = arith.constant 0 : index
    %c0_11 = arith.constant 0 : index
    %12 = vector.load %arg5[%c0_10, %c0_11] : memref<32x128xf32, #tpu.memory_space<vmem>>, vector<32x128xf32>
    %cst_12 = arith.constant dense<0.000000e+00> : vector<32x128xf32>
    %13 = tpu.matmul %11, %12, %cst_12 {dimension_numbers = #tpu.dot_dimension_numbers<[1], [0], [0], [1], [0, 0, 1, 1], [], []>} : vector<32x32xf32>, vector<32x128xf32>, vector<32x128xf32> -> vector<32x128xf32>
    %c0_13 = arith.constant 0 : index
    %c0_14 = arith.constant 0 : index
    %14 = vector.load %arg6[%c0_13, %c0_14] : memref<1x128xf32, #tpu.memory_space<vmem>>, vector<1x128xf32>
    %15 = vector.broadcast %14 : vector<1x128xf32> to vector<32x128xf32>
    %16 = arith.addf %13, %15 : vector<32x128xf32>
    %c0_15 = arith.constant 0 : index
    %c0_16 = arith.constant 0 : index
    %17 = vector.load %arg7[%c0_15, %c0_16] : memref<32x128xf32, #tpu.memory_space<vmem>>, vector<32x128xf32>
    tpu.vector_store %arg7[%c0_15, %c0_16], %16 {strides = array<i32>} : memref<32x128xf32, #tpu.memory_space<vmem>>, vector<32x128xf32>,
    return
  }
  func.func @transform_0(%arg0: i32) -> (i32, i32) {
    %c0_i32 = arith.constant 0 : i32
    %c0_i32_0 = arith.constant 0 : i32
    return %arg0, %c0_i32 : i32, i32
  }
  func.func @transform_1(%arg0: i32) -> (i32, i32) {
    %c0_i32 = arith.constant 0 : i32
    %c0_i32_0 = arith.constant 0 : i32
    return %arg0, %c0_i32 : i32, i32
  }
  func.func @transform_2(%arg0: i32) -> (i32, i32) {
    %c0_i32 = arith.constant 0 : i32
    %c0_i32_0 = arith.constant 0 : i32
    %c0_i32_1 = arith.constant 0 : i32
    return %c0_i32, %c0_i32_0 : i32, i32
  }
  func.func @transform_3(%arg0: i32) -> (i32, i32) {
    %c0_i32 = arith.constant 0 : i32
    %c0_i32_0 = arith.constant 0 : i32
    %c0_i32_1 = arith.constant 0 : i32
    return %c0_i32, %c0_i32_0 : i32, i32
  }
  func.func @transform_4(%arg0: i32) -> (i32, i32) {
    %c0_i32 = arith.constant 0 : i32
    %c0_i32_0 = arith.constant 0 : i32
    %c0_i32_1 = arith.constant 0 : i32
    return %c0_i32, %c0_i32_0 : i32, i32
  }
  func.func @transform_5(%arg0: i32) -> (i32, i32) {
    %c0_i32 = arith.constant 0 : i32
    %c0_i32_0 = arith.constant 0 : i32
    %c0_i32_1 = arith.constant 0 : i32
    return %c0_i32, %c0_i32_0 : i32, i32
  }
  func.func @transform_6(%arg0: i32) -> (i32, i32) {
    %c0_i32 = arith.constant 0 : i32
    %c0_i32_0 = arith.constant 0 : i32
    return %arg0, %c0_i32 : i32, i32
  }
}

module attributes {stable_mosaic.version = 11 : i64} {
  func.func @server_mlp_kernel(%arg0: i32, %arg1: memref<32x32xf32, #tpu.memory_space<vmem>>, %arg2: memref<32x32xf32, #tpu.memory_space<vmem>>, %arg3: memref<64x32xf32, #tpu.memory_space<vmem>>, %arg4: memref<1x32xf32, #tpu.memory_space<vmem>>, %arg5: memref<32x128xf32, #tpu.memory_space<vmem>>, %arg6: memref<1x128xf32, #tpu.memory_space<vmem>>, %arg7: memref<32x128xf32, #tpu.memory_space<vmem>>) attributes {dimension_semantics = [#tpu.dimension_semantics<parallel>], iteration_bounds = array<i64: 2>, scalar_prefetch = 0 : i64, scratch_operands = 0 : i64, tpu.core_type = #tpu.core_type<tc>, window_params = [{transform_indices = @transform_0, window_bounds = array<i64: 32, 32>}, {transform_indices = @transform_1, window_bounds = array<i64: 32, 32>}, {pipeline_mode = #tpu.pipeline_mode<synchronous>, transform_indices = @transform_2, window_bounds = array<i64: 64, 32>}, {pipeline_mode = #tpu.pipeline_mode<synchronous>, transform_indices = @transform_3, window_bounds = array<i64: 1, 32>}, {pipeline_mode = #tpu.pipeline_mode<synchronous>, transform_indices = @transform_4, window_bounds = array<i64: 32, 128>}, {pipeline_mode = #tpu.pipeline_mode<synchronous>, transform_indices = @transform_5, window_bounds = array<i64: 1, 128>}, {transform_indices = @transform_6, window_bounds = array<i64: 32, 128>}]} {
    %c0 = arith.constant 0 : index
    %c0_0 = arith.constant 0 : index
    %0 = vector.load %arg1[%c0, %c0_0] : memref<32x32xf32, #tpu.memory_space<vmem>>, vector<32x32xf32>
    %c0_1 = arith.constant 0 : index
    %c0_2 = arith.constant 0 : index
    %1 = vector.load %arg2[%c0_1, %c0_2] : memref<32x32xf32, #tpu.memory_space<vmem>>, vector<32x32xf32>
    %c0_3 = arith.constant 0 : index
    %c0_4 = arith.constant 0 : index
    %2 = vector.load %arg3[%c0_3, %c0_4] : memref<64x32xf32, #tpu.memory_space<vmem>>, vector<32x32xf32>
    %cst = arith.constant dense<0.000000e+00> : vector<32x32xf32>
    %3 = tpu.matmul %0, %2, %cst {dimension_numbers = #tpu.dot_dimension_numbers<[1], [0], [0], [1], [0, 0, 1, 1], [], []>} : vector<32x32xf32>, vector<32x32xf32>, vector<32x32xf32> -> vector<32x32xf32>
    %c32 = arith.constant 32 : index
    %c0_5 = arith.constant 0 : index
    %4 = vector.load %arg3[%c32, %c0_5] : memref<64x32xf32, #tpu.memory_space<vmem>>, vector<32x32xf32>
    %cst_6 = arith.constant dense<0.000000e+00> : vector<32x32xf32>
    %5 = tpu.matmul %1, %4, %cst_6 {dimension_numbers = #tpu.dot_dimension_numbers<[1], [0], [0], [1], [0, 0, 1, 1], [], []>} : vector<32x32xf32>, vector<32x32xf32>, vector<32x32xf32> -> vector<32x32xf32>
    %6 = arith.addf %3, %5 : vector<32x32xf32>
    %c0_7 = arith.constant 0 : index
    %c0_8 = arith.constant 0 : index
    %7 = vector.load %arg4[%c0_7, %c0_8] : memref<1x32xf32, #tpu.memory_space<vmem>>, vector<1x32xf32>
    %8 = vector.broadcast %7 : vector<1x32xf32> to vector<32x32xf32>
    %9 = arith.addf %6, %8 : vector<32x32xf32>
    %cst_9 = arith.constant 0.000000e+00 : f32
    %10 = vector.broadcast %cst_9 : f32 to vector<32x32xf32>
    %11 = arith.maximumf %9, %10 : vector<32x32xf32>
    %c0_10 = arith.constant 0 : index
    %c0_11 = arith.constant 0 : index
    %12 = vector.load %arg5[%c0_10, %c0_11] : memref<32x128xf32, #tpu.memory_space<vmem>>, vector<32x128xf32>
    %cst_12 = arith.constant dense<0.000000e+00> : vector<32x128xf32>
    %13 = tpu.matmul %11, %12, %cst_12 {dimension_numbers = #tpu.dot_dimension_numbers<[1], [0], [0], [1], [0, 0, 1, 1], [], []>} : vector<32x32xf32>, vector<32x128xf32>, vector<32x128xf32> -> vector<32x128xf32>
    %c0_13 = arith.constant 0 : index
    %c0_14 = arith.constant 0 : index
    %14 = vector.load %arg6[%c0_13, %c0_14] : memref<1x128xf32, #tpu.memory_space<vmem>>, vector<1x128xf32>
    %15 = vector.broadcast %14 : vector<1x128xf32> to vector<32x128xf32>
    %16 = arith.addf %13, %15 : vector<32x128xf32>
    %c0_15 = arith.constant 0 : index
    %c0_16 = arith.constant 0 : index
    %17 = vector.load %arg7[%c0_15, %c0_16] : memref<32x128xf32, #tpu.memory_space<vmem>>, vector<32x128xf32>
    tpu.vector_store %arg7[%c0_15, %c0_16], %16 {strides = array<i32>} : memref<32x128xf32, #tpu.memory_space<vmem>>, vector<32x128xf32>,
    return
  }
  func.func @transform_0(%arg0: i32) -> (i32, i32) {
    %c0_i32 = arith.constant 0 : i32
    %c0_i32_0 = arith.constant 0 : i32
    return %arg0, %c0_i32 : i32, i32
  }
  func.func @transform_1(%arg0: i32) -> (i32, i32) {
    %c0_i32 = arith.constant 0 : i32
    %c0_i32_0 = arith.constant 0 : i32
    return %arg0, %c0_i32 : i32, i32
  }
  func.func @transform_2(%arg0: i32) -> (i32, i32) {
    %c0_i32 = arith.constant 0 : i32
    %c0_i32_0 = arith.constant 0 : i32
    %c0_i32_1 = arith.constant 0 : i32
    return %c0_i32, %c0_i32_0 : i32, i32
  }
  func.func @transform_3(%arg0: i32) -> (i32, i32) {
    %c0_i32 = arith.constant 0 : i32
    %c0_i32_0 = arith.constant 0 : i32
    %c0_i32_1 = arith.constant 0 : i32
    return %c0_i32, %c0_i32_0 : i32, i32
  }
  func.func @transform_4(%arg0: i32) -> (i32, i32) {
    %c0_i32 = arith.constant 0 : i32
    %c0_i32_0 = arith.constant 0 : i32
    %c0_i32_1 = arith.constant 0 : i32
    return %c0_i32, %c0_i32_0 : i32, i32
  }
  func.func @transform_5(%arg0: i32) -> (i32, i32) {
    %c0_i32 = arith.constant 0 : i32
    %c0_i32_0 = arith.constant 0 : i32
    %c0_i32_1 = arith.constant 0 : i32
    return %c0_i32, %c0_i32_0 : i32, i32
  }
  func.func @transform_6(%arg0: i32) -> (i32, i32) {
    %c0_i32 = arith.constant 0 : i32
    %c0_i32_0 = arith.constant 0 : i32
    return %arg0, %c0_i32 : i32, i32
  }
}

</mosaic_0001>

<llo_original>
// kernel: tpu_custom_call.1
$region0: #{tpu_custom_call.1}
  #allocation0 [shape = 'u32[]', space=smem, size = 0x4, offset = 0x4, fixed_abs, tag = 'smem constant byte address 0x4 - core index']
  #allocation1 [shape = 'u32[72,128]{1,0:T(1,128)}', space=vmem, size = 0x9000, scoped, tag = 'internal scratch']
  %s0 = inlined_call_operand.vmem [shape: f32[64,32], index: 0, kind: input, shape index: {}]
  %s1 = inlined_call_operand.vmem [shape: f32[64,32], index: 1, kind: input, shape index: {}]
  %s2 = inlined_call_operand.vmem [shape: f32[64,32], index: 2, kind: input, shape index: {}]
  %s3 = inlined_call_operand.vmem [shape: f32[1,32], index: 3, kind: input, shape index: {}]
  %s4 = inlined_call_operand.vmem [shape: f32[32,128], index: 4, kind: input, shape index: {}]
  %s5 = inlined_call_operand.vmem [shape: f32[1,128], index: 5, kind: input, shape index: {}]
  %s6 = inlined_call_operand.hbm [shape: f32[64,128], index: 6, kind: output, shape index: {}]
  %s7 = sld [smem:[#allocation0]]
  $region57: #{tpu_custom_call.1} parent=0
    _
  %s9 = ssub.s32 1, %s7
  %s10 = scalar_select 0, %s9, %s7
  $region1: #{tpu_custom_call.1} parent=0
    #allocation2 [shape = 'u8[32768]{0}', space=vmem, size = 0x8000, scoped, tag = 'output window, operand 0']
    #allocation3 [shape = 's32[2]{0}', space=sflag, size = 0x8, scoped, tag = 'scoped memory for tpu_custom_call.1']
    %11 = vsyncpa [#allocation3], 0
    %s12 = scalar_lea.sflag [#allocation3], 1
    %13 = vsyncpa %s12, 0
    loop: start=0, step=1, limit=4
    $region2: #{tpu_custom_call.1} parent=1 // loop_pre_header
      _
    $region3: #{tpu_custom_call.1} parent=1 // loop_header
      %s15 = sphi 0, %s19
      %p16 = scmp.ge.s32.totalorder %s15, 4
      %s25 = sphi 0, %s27
      %s28 = sphi 0, %s25
      %s29 = sphi 0, %s28
      %s45 = sphi 0, %s29
      %s51 = sphi 0, %s53
      %s54 = sphi 0, %s51
      %s55 = sphi 0, %s54
      %s71 = sphi 0, %s55
      %s75 = sphi 0, %s75
      %s77 = sphi 0, %s75
      %s78 = sphi 0, %s77
      %s92 = sphi 0, %s78
      %s96 = sphi 0, %s96
      %s98 = sphi 0, %s96
      %s99 = sphi 0, %s98
      %s113 = sphi 0, %s99
      %s117 = sphi 0, %s117
      %s119 = sphi 0, %s117
      %s120 = sphi 0, %s119
      %s134 = sphi 0, %s120
      %s138 = sphi 0, %s138
      %s140 = sphi 0, %s138
      %s141 = sphi 0, %s140
      %s155 = sphi 0, %s141
      %s161 = sphi 0, %s163
      %s164 = sphi 0, %s161
      %s165 = sphi 0, %s164
      %s181 = sphi 0, %s165
    $region4: #{tpu_custom_call.1} parent=1 // loop_header_branch
      %18 = sbr.rel (%p16) target = $region8
    $region5: #{tpu_custom_call.1} parent=1 // loop_body
      %s20 = ssub.s32 %s15, 1
      %s21 = ssub.s32 %s15, 2
      %s22 = sadd.s32 %s15, 1
      %s23 = ssub.s32 %s15, %s22
      %p24 = scmp.eq.s32.totalorder %s23, 0
      %s26 = sadd.s32 %s25, 1
      %s27 = scalar_select %p24, %s25, %s26
      %p30 = pneg %p24
      %p31 = scmp.eq.s32.totalorder %s15, 1
      %p32 = por %p30, %p31
      %p33 = scmp.ne.s32.totalorder %s25, %s28
      %p34 = scmp.eq.s32.totalorder %s15, 0
      %p35 = por %p33, %p34
      %p36 = scmp.ne.s32.totalorder %s25, %s28
      %p37 = scmp.eq.s32.totalorder %s20, 1
      %p38 = por %p36, %p37
      %p39 = scmp.ne.s32.totalorder %s28, %s29
      %p40 = scmp.eq.s32.totalorder %s20, 0
      %p41 = por %p39, %p40
      %p42 = scmp.ne.s32.totalorder %s28, %s29
      %p43 = scmp.eq.s32.totalorder %s21, 1
      %p44 = por %p42, %p43
      %p46 = scmp.ne.s32.totalorder %s29, %s45
      %p47 = scmp.eq.s32.totalorder %s21, 0
      %p48 = por %p46, %p47
      %s49 = ssub.s32 %s15, %s22
      %p50 = scmp.eq.s32.totalorder %s49, 0
      %s52 = sadd.s32 %s51, 1
      %s53 = scalar_select %p50, %s51, %s52
      %p56 = pneg %p50
      %p57 = scmp.eq.s32.totalorder %s15, 1
      %p58 = por %p56, %p57
      %p59 = scmp.ne.s32.totalorder %s51, %s54
      %p60 = scmp.eq.s32.totalorder %s15, 0
      %p61 = por %p59, %p60
      %p62 = scmp.ne.s32.totalorder %s51, %s54
      %p63 = scmp.eq.s32.totalorder %s20, 1
      %p64 = por %p62, %p63
      %p65 = scmp.ne.s32.totalorder %s54, %s55
      %p66 = scmp.eq.s32.totalorder %s20, 0
      %p67 = por %p65, %p66
      %p68 = scmp.ne.s32.totalorder %s54, %s55
      %p69 = scmp.eq.s32.totalorder %s21, 1
      %p70 = por %p68, %p69
      %p72 = scmp.ne.s32.totalorder %s55, %s71
      %p73 = scmp.eq.s32.totalorder %s21, 0
      %p74 = por %p72, %p73
      %s76 = sadd.s32 %s75, 1
      %p79 = scmp.eq.s32.totalorder %s15, 1
      %p80 = scmp.ne.s32.totalorder %s75, %s77
      %p81 = scmp.eq.s32.totalorder %s15, 0
      %p82 = por %p80, %p81
      %p83 = scmp.ne.s32.totalorder %s75, %s77
      %p84 = scmp.eq.s32.totalorder %s20, 1
      %p85 = por %p83, %p84
      %p86 = scmp.ne.s32.totalorder %s77, %s78
      %p87 = scmp.eq.s32.totalorder %s20, 0
      %p88 = por %p86, %p87
      %p89 = scmp.ne.s32.totalorder %s77, %s78
      %p90 = scmp.eq.s32.totalorder %s21, 1
      %p91 = por %p89, %p90
      %p93 = scmp.ne.s32.totalorder %s78, %s92
      %p94 = scmp.eq.s32.totalorder %s21, 0
      %p95 = por %p93, %p94
      %s97 = sadd.s32 %s96, 1
      %p100 = scmp.eq.s32.totalorder %s15, 1
      %p101 = scmp.ne.s32.totalorder %s96, %s98
      %p102 = scmp.eq.s32.totalorder %s15, 0
      %p103 = por %p101, %p102
      %p104 = scmp.ne.s32.totalorder %s96, %s98
      %p105 = scmp.eq.s32.totalorder %s20, 1
      %p106 = por %p104, %p105
      %p107 = scmp.ne.s32.totalorder %s98, %s99
      %p108 = scmp.eq.s32.totalorder %s20, 0
      %p109 = por %p107, %p108
      %p110 = scmp.ne.s32.totalorder %s98, %s99
      %p111 = scmp.eq.s32.totalorder %s21, 1
      %p112 = por %p110, %p111
      %p114 = scmp.ne.s32.totalorder %s99, %s113
      %p115 = scmp.eq.s32.totalorder %s21, 0
      %p116 = por %p114, %p115
      %s118 = sadd.s32 %s117, 1
      %p121 = scmp.eq.s32.totalorder %s15, 1
      %p122 = scmp.ne.s32.totalorder %s117, %s119
      %p123 = scmp.eq.s32.totalorder %s15, 0
      %p124 = por %p122, %p123
      %p125 = scmp.ne.s32.totalorder %s117, %s119
      %p126 = scmp.eq.s32.totalorder %s20, 1
      %p127 = por %p125, %p126
      %p128 = scmp.ne.s32.totalorder %s119, %s120
      %p129 = scmp.eq.s32.totalorder %s20, 0
      %p130 = por %p128, %p129
      %p131 = scmp.ne.s32.totalorder %s119, %s120
      %p132 = scmp.eq.s32.totalorder %s21, 1
      %p133 = por %p131, %p132
      %p135 = scmp.ne.s32.totalorder %s120, %s134
      %p136 = scmp.eq.s32.totalorder %s21, 0
      %p137 = por %p135, %p136
      %s139 = sadd.s32 %s138, 1
      %p142 = scmp.eq.s32.totalorder %s15, 1
      %p143 = scmp.ne.s32.totalorder %s138, %s140
      %p144 = scmp.eq.s32.totalorder %s15, 0
      %p145 = por %p143, %p144
      %p146 = scmp.ne.s32.totalorder %s138, %s140
      %p147 = scmp.eq.s32.totalorder %s20, 1
      %p148 = por %p146, %p147
      %p149 = scmp.ne.s32.totalorder %s140, %s141
      %p150 = scmp.eq.s32.totalorder %s20, 0
      %p151 = por %p149, %p150
      %p152 = scmp.ne.s32.totalorder %s140, %s141
      %p153 = scmp.eq.s32.totalorder %s21, 1
      %p154 = por %p152, %p153
      %p156 = scmp.ne.s32.totalorder %s141, %s155
      %p157 = scmp.eq.s32.totalorder %s21, 0
      %p158 = por %p156, %p157
      %s159 = ssub.s32 %s15, %s22
      %p160 = scmp.eq.s32.totalorder %s159, 0
      %s162 = sadd.s32 %s161, 1
      %s163 = scalar_select %p160, %s161, %s162
      %p166 = pneg %p160
      %p167 = scmp.eq.s32.totalorder %s15, 1
      %p168 = por %p166, %p167
      %p169 = scmp.ne.s32.totalorder %s161, %s164
      %p170 = scmp.eq.s32.totalorder %s15, 0
      %p171 = por %p169, %p170
      %p172 = scmp.ne.s32.totalorder %s161, %s164
      %p173 = scmp.eq.s32.totalorder %s20, 1
      %p174 = por %p172, %p173
      %p175 = scmp.ne.s32.totalorder %s164, %s165
      %p176 = scmp.eq.s32.totalorder %s20, 0
      %p177 = por %p175, %p176
      %p178 = scmp.ne.s32.totalorder %s164, %s165
      %p179 = scmp.eq.s32.totalorder %s21, 1
      %p180 = por %p178, %p179
      %p182 = scmp.ne.s32.totalorder %s165, %s181
      %p183 = scmp.eq.s32.totalorder %s21, 0
      %p184 = por %p182, %p183
      %p185 = scmp.le.s32.totalorder 1, %s15
      %p186 = scmp.lt.s32.totalorder %s15, 3
      %p187 = pnand %p185, %p186
      %p188 = pneg %p187
      // Predicated region
      $region9: #{tpu_custom_call.1} parent=5 // pred_check
        _
      $region10: #{tpu_custom_call.1} parent=5 // pred_check_branch
        %190 = sbr.rel (%p187) target = $region12
      $region11: #{tpu_custom_call.1} parent=5 // pred_region
        %s191 = ssub.s32 %s15, 1
        // Predicated region
        $region13: #{tpu_custom_call.1} parent=11 // pred_check
          %p192 = pneg %p88
        $region14: #{tpu_custom_call.1} parent=11 // pred_check_branch
          %194 = sbr.rel (%p192) target = $region16
        $region15: #{tpu_custom_call.1} parent=11 // pred_region
          _
        $region16: #{tpu_custom_call.1} parent=11 // pred_fallthru
          _
        // Predicated region
        $region17: #{tpu_custom_call.1} parent=11 // pred_check
          %p195 = pneg %p109
        $region18: #{tpu_custom_call.1} parent=11 // pred_check_branch
          %197 = sbr.rel (%p195) target = $region20
        $region19: #{tpu_custom_call.1} parent=11 // pred_region
          _
        $region20: #{tpu_custom_call.1} parent=11 // pred_fallthru
          _
        // Predicated region
        $region21: #{tpu_custom_call.1} parent=11 // pred_check
          %p198 = pneg %p130
        $region22: #{tpu_custom_call.1} parent=11 // pred_check_branch
          %200 = sbr.rel (%p198) target = $region24
        $region23: #{tpu_custom_call.1} parent=11 // pred_region
          _
        $region24: #{tpu_custom_call.1} parent=11 // pred_fallthru
          _
        // Predicated region
        $region25: #{tpu_custom_call.1} parent=11 // pred_check
          %p201 = pneg %p151
        $region26: #{tpu_custom_call.1} parent=11 // pred_check_branch
          %203 = sbr.rel (%p201) target = $region28
        $region27: #{tpu_custom_call.1} parent=11 // pred_region
          _
        $region28: #{tpu_custom_call.1} parent=11 // pred_fallthru
          _
      $region12: #{tpu_custom_call.1} parent=5 // pred_fallthru
        _
      %p204 = scmp.lt.s32.totalorder %s15, 2
      // Predicated region
      $region29: #{tpu_custom_call.1} parent=5 // pred_check
        %p205 = pneg %p204
      $region30: #{tpu_custom_call.1} parent=5 // pred_check_branch
        %207 = sbr.rel (%p205) target = $region32
      $region31: #{tpu_custom_call.1} parent=5 // pred_region
        // Predicated region
        $region33: #{tpu_custom_call.1} parent=31 // pred_check
          %p208 = pneg %p35
        $region34: #{tpu_custom_call.1} parent=31 // pred_check_branch
          %210 = sbr.rel (%p208) target = $region36
        $region35: #{tpu_custom_call.1} parent=31 // pred_region
          %s211 = smul.u32 4, %s15
          %p212 = scmp.lt.s32.totalorder %s211, 7
          %s213 = scalar_select %p212, %s211, 7
          %s214 = smul.addr %s213, 8
          %s215 = scalar_lea.vmem %s0, %s214
          %s216 = smul.u32 4, %s15
        $region36: #{tpu_custom_call.1} parent=31 // pred_fallthru
          _
        // Predicated region
        $region37: #{tpu_custom_call.1} parent=31 // pred_check
          %p217 = pneg %p61
        $region38: #{tpu_custom_call.1} parent=31 // pred_check_branch
          %219 = sbr.rel (%p217) target = $region40
        $region39: #{tpu_custom_call.1} parent=31 // pred_region
          %s220 = smul.u32 4, %s15
          %p221 = scmp.lt.s32.totalorder %s220, 7
          %s222 = scalar_select %p221, %s220, 7
          %s223 = smul.addr %s222, 8
          %s224 = scalar_lea.vmem %s1, %s223
          %s225 = smul.u32 4, %s15
        $region40: #{tpu_custom_call.1} parent=31 // pred_fallthru
          _
      $region32: #{tpu_custom_call.1} parent=5 // pred_fallthru
        _
      %p226 = scmp.le.s32.totalorder 1, %s15
      %p227 = scmp.lt.s32.totalorder %s15, 3
      %p228 = pnand %p226, %p227
      %p229 = pneg %p228
      // Predicated region
      $region41: #{tpu_custom_call.1} parent=5 // pred_check
        _
      $region42: #{tpu_custom_call.1} parent=5 // pred_check_branch
        %231 = sbr.rel (%p228) target = $region44
      $region43: #{tpu_custom_call.1} parent=5 // pred_region
        %s232 = ssub.s32 %s15, 1
        %s233 = smul.u32 4, %s20
        %p234 = scmp.lt.s32.totalorder %s233, 7
        %s235 = scalar_select %p234, %s233, 7
        %s236 = smul.addr %s235, 8
        %s237 = scalar_lea.vmem %s0, %s236
        %p238 = pneg %p41
        %p239 = pneg %p38
        %s240 = smul.u32 4, %s20
        %p241 = scmp.lt.s32.totalorder %s240, 7
        %s242 = scalar_select %p241, %s240, 7
        %s243 = smul.addr %s242, 8
        %s244 = scalar_lea.vmem %s1, %s243
        %p245 = pneg %p67
        %p246 = pneg %p64
        %p247 = pneg %p88
        %p248 = pneg %p85
        %p249 = pneg %p109
        %p250 = pneg %p106
        %p251 = pneg %p130
        %p252 = pneg %p127
        %p253 = pneg %p151
        %p254 = pneg %p148
        %p255 = pneg %p177
        %p256 = pneg %p174
        %s257 = sand.u32 %s164, 1
        %s258 = scalar_lea.sflag [#allocation3], %s257
        %s259 = sand.u32 %s164, 1
        %s260 = smul.addr %s259, 32
        %s261 = scalar_lea.vmem [#allocation2], %s260
        %s262 = smul.u32 4, %s20
        %p263 = scmp.lt.s32.totalorder %s262, 7
        %s264 = scalar_select %p263, %s262, 7
        %s265 = smul.addr %s264, 8
        %s266 = scalar_lea.vmem %s0, %s265
        %s267 = smul.u32 4, %s20
        %s268 = smul.u32 4, %s20
        %p269 = scmp.lt.s32.totalorder %s268, 7
        %s270 = scalar_select %p269, %s268, 7
        %s271 = smul.addr %s270, 8
        %s272 = scalar_lea.vmem %s1, %s271
        %s273 = smul.u32 4, %s20
        %s274 = smul.u32 4, %s20
        %v275 = vld [vmem:[%s266] sm:$0xff]
        %v276 = vld [vmem:[%s266 + $0x8] sm:$0xff]
        %v277 = vld [vmem:[%s266 + $0x10] sm:$0xff]
        %v278 = vld [vmem:[%s266 + $0x18] sm:$0xff]
        %v279 = vld [vmem:[%s272] sm:$0xff]
        %v280 = vld [vmem:[%s272 + $0x8] sm:$0xff]
        %v281 = vld [vmem:[%s272 + $0x10] sm:$0xff]
        %v282 = vld [vmem:[%s272 + $0x18] sm:$0xff]
        %v283 = vld [vmem:[%s2] sm:$0xff]
        %v284 = vld [vmem:[%s2 + $0x8] sm:$0xff]
        %v285 = vld [vmem:[%s2 + $0x10] sm:$0xff]
        %v286 = vld [vmem:[%s2 + $0x18] sm:$0xff]
        %v287 = vld [vmem:[%s2 + $0x20] sm:$0xff]
        %v288 = vld [vmem:[%s2 + $0x28] sm:$0xff]
        %v289 = vld [vmem:[%s2 + $0x30] sm:$0xff]
        %v290 = vld [vmem:[%s2 + $0x38] sm:$0xff]
        %vm291 = vcmask 261120
        %v293 = vsel %vm291, %v279, 0
        %v296 = vsel %vm291, %v280, 0
        %v299 = vsel %vm291, %v281, 0
        %v302 = vsel %vm291, %v282, 0
        %304 = vmatpush.msra.mxu0 0.0
        %305 = vmatpush.msra.mxu0 0.0
        %306 = vmatpush.msra.mxu0 0.0
        %307 = vmatpush.msra.mxu0 0.0
        %308 = vmatpush.msra.mxu0 0.0
        %309 = vmatpush.msra.mxu0 0.0
        %310 = vmatpush.msra.mxu0 0.0
        %311 = vmatpush.msra.mxu0 0.0
        %312 = vmatpush.msra.mxu0 0.0
        %313 = vmatpush.msra.mxu0 0.0
        %314 = vmatpush.msra.mxu0 0.0
        %315 = vmatpush.msra.mxu0 0.0
        %316 = vmatpush.msra.mxu0 %v290
        %317 = vmatpush.msra.mxu0 %v289
        %318 = vmatpush.msra.mxu0 %v288
        %319 = vmatpush.msra.mxu0 %v287
        %320 = vmatmul.f32.gmra.mxu0 %v293
        %v321 = vpop.f32.mrf.mxu0
        %v322 = vadd.f32 0.0, %v321
        %323 = vmatmul.f32.gmra.mxu0 %v296
        %v324 = vpop.f32.mrf.mxu0
        %v325 = vadd.f32 0.0, %v324
        %326 = vmatmul.f32.gmra.mxu0 %v299
        %v327 = vpop.f32.mrf.mxu0
        %v328 = vadd.f32 0.0, %v327
        %329 = vmatmul.f32.gmra.mxu0 %v302
        %v330 = vpop.f32.mrf.mxu0
        %v331 = vadd.f32 0.0, %v330
        %332 = vdwg.mxu0
        %v334 = vsel %vm291, %v275, 0
        %v337 = vsel %vm291, %v276, 0
        %v340 = vsel %vm291, %v277, 0
        %v343 = vsel %vm291, %v278, 0
        %345 = vmatpush.msra.mxu0 0.0
        %346 = vmatpush.msra.mxu0 0.0
        %347 = vmatpush.msra.mxu0 0.0
        %348 = vmatpush.msra.mxu0 0.0
        %349 = vmatpush.msra.mxu0 0.0
        %350 = vmatpush.msra.mxu0 0.0
        %351 = vmatpush.msra.mxu0 0.0
        %352 = vmatpush.msra.mxu0 0.0
        %353 = vmatpush.msra.mxu0 0.0
        %354 = vmatpush.msra.mxu0 0.0
        %355 = vmatpush.msra.mxu0 0.0
        %356 = vmatpush.msra.mxu0 0.0
        %357 = vmatpush.msra.mxu0 %v286
        %358 = vmatpush.msra.mxu0 %v285
        %359 = vmatpush.msra.mxu0 %v284
        %360 = vmatpush.msra.mxu0 %v283
        %361 = vmatmul.f32.gmra.mxu0 %v334
        %v362 = vpop.f32.mrf.mxu0
        %v363 = vadd.f32 %v322, %v362
        %364 = vmatmul.f32.gmra.mxu0 %v337
        %v365 = vpop.f32.mrf.mxu0
        %v366 = vadd.f32 %v325, %v365
        %367 = vmatmul.f32.gmra.mxu0 %v340
        %v368 = vpop.f32.mrf.mxu0
        %v369 = vadd.f32 %v328, %v368
        %370 = vmatmul.f32.gmra.mxu0 %v343
        %v371 = vpop.f32.mrf.mxu0
        %v372 = vadd.f32 %v331, %v371
        %373 = vdwg.mxu0
        %v374 = vld [vmem:[%s3] sm:$0x1]
        %v376 = vperm.slane %v374, 0
        %v378 = vadd.f32 %v363, %v376
        %v379 = vadd.f32 %v366, %v376
        %v380 = vadd.f32 %v369, %v376
        %v381 = vadd.f32 %v372, %v376
        %v382 = vmax.f32 %v378, 0.0
        %v383 = vmax.f32 %v379, 0.0
        %v384 = vmax.f32 %v380, 0.0
        %v385 = vmax.f32 %v381, 0.0
        %v386 = vld [vmem:[%s4] sm:$0xff]
        %v387 = vld [vmem:[%s4 + $0x8] sm:$0xff]
        %v388 = vld [vmem:[%s4 + $0x10] sm:$0xff]
        %v389 = vld [vmem:[%s4 + $0x18] sm:$0xff]
        %v390 = vld [vmem:[%s5] sm:$0x1]
        %v392 = vperm.slane %v390, 0
        %v395 = vsel %vm291, %v382, 0
        %v398 = vsel %vm291, %v383, 0
        %v401 = vsel %vm291, %v384, 0
        %v404 = vsel %vm291, %v385, 0
        %406 = vmatpush.msra.mxu0 0.0
        %407 = vmatpush.msra.mxu0 0.0
        %408 = vmatpush.msra.mxu0 0.0
        %409 = vmatpush.msra.mxu0 0.0
        %410 = vmatpush.msra.mxu0 0.0
        %411 = vmatpush.msra.mxu0 0.0
        %412 = vmatpush.msra.mxu0 0.0
        %413 = vmatpush.msra.mxu0 0.0
        %414 = vmatpush.msra.mxu0 0.0
        %415 = vmatpush.msra.mxu0 0.0
        %416 = vmatpush.msra.mxu0 0.0
        %417 = vmatpush.msra.mxu0 0.0
        %418 = vmatpush.msra.mxu0 %v389
        %419 = vmatpush.msra.mxu0 %v388
        %420 = vmatpush.msra.mxu0 %v387
        %421 = vmatpush.msra.mxu0 %v386
        %422 = vmatmul.f32.gmra.mxu0 %v395
        %v423 = vpop.f32.mrf.mxu0
        %v424 = vadd.f32 %v392, %v423
        %425 = vmatmul.f32.gmra.mxu0 %v398
        %v426 = vpop.f32.mrf.mxu0
        %v427 = vadd.f32 %v392, %v426
        %428 = vmatmul.f32.gmra.mxu0 %v401
        %v429 = vpop.f32.mrf.mxu0
        %v430 = vadd.f32 %v392, %v429
        %431 = vmatmul.f32.gmra.mxu0 %v404
        %v432 = vpop.f32.mrf.mxu0
        %v433 = vadd.f32 %v392, %v432
        %434 = vdwg.mxu0
        %435 = vst [vmem:[%s261] sm:$0xff] %v424
        %436 = vst [vmem:[%s261 + $0x8] sm:$0xff] %v427
        %437 = vst [vmem:[%s261 + $0x10] sm:$0xff] %v430
        %438 = vst [vmem:[%s261 + $0x18] sm:$0xff] %v433
        %s439 = sand.u32 %s164, 1
        %s440 = scalar_lea.sflag [#allocation3], %s439
        %s441 = sand.u32 %s164, 1
        %s442 = smul.addr %s441, 32
        %s443 = scalar_lea.vmem [#allocation2], %s442
        // Predicated region
        $region45: #{tpu_custom_call.1} parent=43 // pred_check
          %p444 = pneg %p174
        $region46: #{tpu_custom_call.1} parent=43 // pred_check_branch
          %446 = sbr.rel (%p444) target = $region48
        $region47: #{tpu_custom_call.1} parent=43 // pred_region
          %s447 = smul.u32 4, %s20
          %449 = vsyncadd %s440, 0
          %s450 = smul.addr %s447, 8
          %s451 = scalar_lea.hbm %s6, %s450
          %s452 = sshll.u32 %s443, 4
          %s453 = int_to_ptr.vmem [resolvable:$true] %s452
          %s454 = sshll.u32 %s451, 4
          %s455 = int_to_ptr.hbm [resolvable:$true] %s454
          %460 = dma.vmem_to_hbm [thread:$0]  %s453, 512, %s455, %s440, 128, 128, 8
        $region48: #{tpu_custom_call.1} parent=43 // pred_fallthru
          _
      $region44: #{tpu_custom_call.1} parent=5 // pred_fallthru
        _
      %p461 = scmp.le.s32.totalorder 2, %s15
      // Predicated region
      $region49: #{tpu_custom_call.1} parent=5 // pred_check
        %p462 = pneg %p461
      $region50: #{tpu_custom_call.1} parent=5 // pred_check_branch
        %464 = sbr.rel (%p462) target = $region52
      $region51: #{tpu_custom_call.1} parent=5 // pred_region
        %s465 = ssub.s32 %s15, 2
        // Predicated region
        $region53: #{tpu_custom_call.1} parent=51 // pred_check
          %p466 = pneg %p180
        $region54: #{tpu_custom_call.1} parent=51 // pred_check_branch
          %468 = sbr.rel (%p466) target = $region56
        $region55: #{tpu_custom_call.1} parent=51 // pred_region
          %s469 = sand.u32 %s165, 1
          %s470 = scalar_lea.sflag [#allocation3], %s469
          %s471 = sand.u32 %s165, 1
          %s472 = smul.addr %s471, 32
          %s473 = scalar_lea.vmem [#allocation2], %s472
          %475 = dma.done %s470, 512
        $region56: #{tpu_custom_call.1} parent=51 // pred_fallthru
          _
      $region52: #{tpu_custom_call.1} parent=5 // pred_fallthru
        _
    $region6: #{tpu_custom_call.1} parent=1 // loop_footer
      %s19 = sadd.s32 1, %s15
    $region7: #{tpu_custom_call.1} parent=1 // loop_footer_branch
      %14 = sbr.rel target = $region3
    $region8: #{tpu_custom_call.1} parent=1 // loop_exit
      _
    %476 = vsyncpa [#allocation3], 1
    %s477 = scalar_lea.sflag [#allocation3], 1
    %478 = vsyncpa %s477, 1

// kernel: tpu_custom_call.1
$region0: #{tpu_custom_call.1}
  #allocation0 [shape = 'u32[]', space=smem, size = 0x4, offset = 0x4, fixed_abs, tag = 'smem constant byte address 0x4 - core index']
  #allocation1 [shape = 'u32[72,128]{1,0:T(1,128)}', space=vmem, size = 0x9000, scoped, tag = 'internal scratch']
  %s0 = inlined_call_operand.vmem [shape: f32[64,32], index: 0, kind: input, shape index: {}]
  %s1 = inlined_call_operand.vmem [shape: f32[64,32], index: 1, kind: input, shape index: {}]
  %s2 = inlined_call_operand.vmem [shape: f32[64,32], index: 2, kind: input, shape index: {}]
  %s3 = inlined_call_operand.vmem [shape: f32[1,32], index: 3, kind: input, shape index: {}]
  %s4 = inlined_call_operand.vmem [shape: f32[32,128], index: 4, kind: input, shape index: {}]
  %s5 = inlined_call_operand.vmem [shape: f32[1,128], index: 5, kind: input, shape index: {}]
  %s6 = inlined_call_operand.hbm [shape: f32[64,128], index: 6, kind: output, shape index: {}]
  %s7 = sld [smem:[#allocation0]]
  $region57: #{tpu_custom_call.1} parent=0
    _
  %s9 = ssub.s32 1, %s7
  %s10 = scalar_select 0, %s9, %s7
  $region1: #{tpu_custom_call.1} parent=0
    #allocation2 [shape = 'u8[32768]{0}', space=vmem, size = 0x8000, scoped, tag = 'output window, operand 0']
    #allocation3 [shape = 's32[2]{0}', space=sflag, size = 0x8, scoped, tag = 'scoped memory for tpu_custom_call.1']
    %11 = vsyncpa [#allocation3], 0
    %s12 = scalar_lea.sflag [#allocation3], 1
    %13 = vsyncpa %s12, 0
    loop: start=0, step=1, limit=4
    $region2: #{tpu_custom_call.1} parent=1 // loop_pre_header
      _
    $region3: #{tpu_custom_call.1} parent=1 // loop_header
      %s15 = sphi 0, %s19
      %p16 = scmp.ge.s32.totalorder %s15, 4
      %s25 = sphi 0, %s27
      %s28 = sphi 0, %s25
      %s29 = sphi 0, %s28
      %s45 = sphi 0, %s29
      %s51 = sphi 0, %s53
      %s54 = sphi 0, %s51
      %s55 = sphi 0, %s54
      %s71 = sphi 0, %s55
      %s75 = sphi 0, %s75
      %s77 = sphi 0, %s75
      %s78 = sphi 0, %s77
      %s92 = sphi 0, %s78
      %s96 = sphi 0, %s96
      %s98 = sphi 0, %s96
      %s99 = sphi 0, %s98
      %s113 = sphi 0, %s99
      %s117 = sphi 0, %s117
      %s119 = sphi 0, %s117
      %s120 = sphi 0, %s119
      %s134 = sphi 0, %s120
      %s138 = sphi 0, %s138
      %s140 = sphi 0, %s138
      %s141 = sphi 0, %s140
      %s155 = sphi 0, %s141
      %s161 = sphi 0, %s163
      %s164 = sphi 0, %s161
      %s165 = sphi 0, %s164
      %s181 = sphi 0, %s165
    $region4: #{tpu_custom_call.1} parent=1 // loop_header_branch
      %18 = sbr.rel (%p16) target = $region8
    $region5: #{tpu_custom_call.1} parent=1 // loop_body
      %s20 = ssub.s32 %s15, 1
      %s21 = ssub.s32 %s15, 2
      %s22 = sadd.s32 %s15, 1
      %s23 = ssub.s32 %s15, %s22
      %p24 = scmp.eq.s32.totalorder %s23, 0
      %s26 = sadd.s32 %s25, 1
      %s27 = scalar_select %p24, %s25, %s26
      %p30 = pneg %p24
      %p31 = scmp.eq.s32.totalorder %s15, 1
      %p32 = por %p30, %p31
      %p33 = scmp.ne.s32.totalorder %s25, %s28
      %p34 = scmp.eq.s32.totalorder %s15, 0
      %p35 = por %p33, %p34
      %p36 = scmp.ne.s32.totalorder %s25, %s28
      %p37 = scmp.eq.s32.totalorder %s20, 1
      %p38 = por %p36, %p37
      %p39 = scmp.ne.s32.totalorder %s28, %s29
      %p40 = scmp.eq.s32.totalorder %s20, 0
      %p41 = por %p39, %p40
      %p42 = scmp.ne.s32.totalorder %s28, %s29
      %p43 = scmp.eq.s32.totalorder %s21, 1
      %p44 = por %p42, %p43
      %p46 = scmp.ne.s32.totalorder %s29, %s45
      %p47 = scmp.eq.s32.totalorder %s21, 0
      %p48 = por %p46, %p47
      %s49 = ssub.s32 %s15, %s22
      %p50 = scmp.eq.s32.totalorder %s49, 0
      %s52 = sadd.s32 %s51, 1
      %s53 = scalar_select %p50, %s51, %s52
      %p56 = pneg %p50
      %p57 = scmp.eq.s32.totalorder %s15, 1
      %p58 = por %p56, %p57
      %p59 = scmp.ne.s32.totalorder %s51, %s54
      %p60 = scmp.eq.s32.totalorder %s15, 0
      %p61 = por %p59, %p60
      %p62 = scmp.ne.s32.totalorder %s51, %s54
      %p63 = scmp.eq.s32.totalorder %s20, 1
      %p64 = por %p62, %p63
      %p65 = scmp.ne.s32.totalorder %s54, %s55
      %p66 = scmp.eq.s32.totalorder %s20, 0
      %p67 = por %p65, %p66
      %p68 = scmp.ne.s32.totalorder %s54, %s55
      %p69 = scmp.eq.s32.totalorder %s21, 1
      %p70 = por %p68, %p69
      %p72 = scmp.ne.s32.totalorder %s55, %s71
      %p73 = scmp.eq.s32.totalorder %s21, 0
      %p74 = por %p72, %p73
      %s76 = sadd.s32 %s75, 1
      %p79 = scmp.eq.s32.totalorder %s15, 1
      %p80 = scmp.ne.s32.totalorder %s75, %s77
      %p81 = scmp.eq.s32.totalorder %s15, 0
      %p82 = por %p80, %p81
      %p83 = scmp.ne.s32.totalorder %s75, %s77
      %p84 = scmp.eq.s32.totalorder %s20, 1
      %p85 = por %p83, %p84
      %p86 = scmp.ne.s32.totalorder %s77, %s78
      %p87 = scmp.eq.s32.totalorder %s20, 0
      %p88 = por %p86, %p87
      %p89 = scmp.ne.s32.totalorder %s77, %s78
      %p90 = scmp.eq.s32.totalorder %s21, 1
      %p91 = por %p89, %p90
      %p93 = scmp.ne.s32.totalorder %s78, %s92
      %p94 = scmp.eq.s32.totalorder %s21, 0
      %p95 = por %p93, %p94
      %s97 = sadd.s32 %s96, 1
      %p100 = scmp.eq.s32.totalorder %s15, 1
      %p101 = scmp.ne.s32.totalorder %s96, %s98
      %p102 = scmp.eq.s32.totalorder %s15, 0
      %p103 = por %p101, %p102
      %p104 = scmp.ne.s32.totalorder %s96, %s98
      %p105 = scmp.eq.s32.totalorder %s20, 1
      %p106 = por %p104, %p105
      %p107 = scmp.ne.s32.totalorder %s98, %s99
      %p108 = scmp.eq.s32.totalorder %s20, 0
      %p109 = por %p107, %p108
      %p110 = scmp.ne.s32.totalorder %s98, %s99
      %p111 = scmp.eq.s32.totalorder %s21, 1
      %p112 = por %p110, %p111
      %p114 = scmp.ne.s32.totalorder %s99, %s113
      %p115 = scmp.eq.s32.totalorder %s21, 0
      %p116 = por %p114, %p115
      %s118 = sadd.s32 %s117, 1
      %p121 = scmp.eq.s32.totalorder %s15, 1
      %p122 = scmp.ne.s32.totalorder %s117, %s119
      %p123 = scmp.eq.s32.totalorder %s15, 0
      %p124 = por %p122, %p123
      %p125 = scmp.ne.s32.totalorder %s117, %s119
      %p126 = scmp.eq.s32.totalorder %s20, 1
      %p127 = por %p125, %p126
      %p128 = scmp.ne.s32.totalorder %s119, %s120
      %p129 = scmp.eq.s32.totalorder %s20, 0
      %p130 = por %p128, %p129
      %p131 = scmp.ne.s32.totalorder %s119, %s120
      %p132 = scmp.eq.s32.totalorder %s21, 1
      %p133 = por %p131, %p132
      %p135 = scmp.ne.s32.totalorder %s120, %s134
      %p136 = scmp.eq.s32.totalorder %s21, 0
      %p137 = por %p135, %p136
      %s139 = sadd.s32 %s138, 1
      %p142 = scmp.eq.s32.totalorder %s15, 1
      %p143 = scmp.ne.s32.totalorder %s138, %s140
      %p144 = scmp.eq.s32.totalorder %s15, 0
      %p145 = por %p143, %p144
      %p146 = scmp.ne.s32.totalorder %s138, %s140
      %p147 = scmp.eq.s32.totalorder %s20, 1
      %p148 = por %p146, %p147
      %p149 = scmp.ne.s32.totalorder %s140, %s141
      %p150 = scmp.eq.s32.totalorder %s20, 0
      %p151 = por %p149, %p150
      %p152 = scmp.ne.s32.totalorder %s140, %s141
      %p153 = scmp.eq.s32.totalorder %s21, 1
      %p154 = por %p152, %p153
      %p156 = scmp.ne.s32.totalorder %s141, %s155
      %p157 = scmp.eq.s32.totalorder %s21, 0
      %p158 = por %p156, %p157
      %s159 = ssub.s32 %s15, %s22
      %p160 = scmp.eq.s32.totalorder %s159, 0
      %s162 = sadd.s32 %s161, 1
      %s163 = scalar_select %p160, %s161, %s162
      %p166 = pneg %p160
      %p167 = scmp.eq.s32.totalorder %s15, 1
      %p168 = por %p166, %p167
      %p169 = scmp.ne.s32.totalorder %s161, %s164
      %p170 = scmp.eq.s32.totalorder %s15, 0
      %p171 = por %p169, %p170
      %p172 = scmp.ne.s32.totalorder %s161, %s164
      %p173 = scmp.eq.s32.totalorder %s20, 1
      %p174 = por %p172, %p173
      %p175 = scmp.ne.s32.totalorder %s164, %s165
      %p176 = scmp.eq.s32.totalorder %s20, 0
      %p177 = por %p175, %p176
      %p178 = scmp.ne.s32.totalorder %s164, %s165
      %p179 = scmp.eq.s32.totalorder %s21, 1
      %p180 = por %p178, %p179
      %p182 = scmp.ne.s32.totalorder %s165, %s181
      %p183 = scmp.eq.s32.totalorder %s21, 0
      %p184 = por %p182, %p183
      %p185 = scmp.le.s32.totalorder 1, %s15
      %p186 = scmp.lt.s32.totalorder %s15, 3
      %p187 = pnand %p185, %p186
      %p188 = pneg %p187
      // Predicated region
      $region9: #{tpu_custom_call.1} parent=5 // pred_check
        _
      $region10: #{tpu_custom_call.1} parent=5 // pred_check_branch
        %190 = sbr.rel (%p187) target = $region12
      $region11: #{tpu_custom_call.1} parent=5 // pred_region
        %s191 = ssub.s32 %s15, 1
        // Predicated region
        $region13: #{tpu_custom_call.1} parent=11 // pred_check
          %p192 = pneg %p88
        $region14: #{tpu_custom_call.1} parent=11 // pred_check_branch
          %194 = sbr.rel (%p192) target = $region16
        $region15: #{tpu_custom_call.1} parent=11 // pred_region
          _
        $region16: #{tpu_custom_call.1} parent=11 // pred_fallthru
          _
        // Predicated region
        $region17: #{tpu_custom_call.1} parent=11 // pred_check
          %p195 = pneg %p109
        $region18: #{tpu_custom_call.1} parent=11 // pred_check_branch
          %197 = sbr.rel (%p195) target = $region20
        $region19: #{tpu_custom_call.1} parent=11 // pred_region
          _
        $region20: #{tpu_custom_call.1} parent=11 // pred_fallthru
          _
        // Predicated region
        $region21: #{tpu_custom_call.1} parent=11 // pred_check
          %p198 = pneg %p130
        $region22: #{tpu_custom_call.1} parent=11 // pred_check_branch
          %200 = sbr.rel (%p198) target = $region24
        $region23: #{tpu_custom_call.1} parent=11 // pred_region
          _
        $region24: #{tpu_custom_call.1} parent=11 // pred_fallthru
          _
        // Predicated region
        $region25: #{tpu_custom_call.1} parent=11 // pred_check
          %p201 = pneg %p151
        $region26: #{tpu_custom_call.1} parent=11 // pred_check_branch
          %203 = sbr.rel (%p201) target = $region28
        $region27: #{tpu_custom_call.1} parent=11 // pred_region
          _
        $region28: #{tpu_custom_call.1} parent=11 // pred_fallthru
          _
      $region12: #{tpu_custom_call.1} parent=5 // pred_fallthru
        _
      %p204 = scmp.lt.s32.totalorder %s15, 2
      // Predicated region
      $region29: #{tpu_custom_call.1} parent=5 // pred_check
        %p205 = pneg %p204
      $region30: #{tpu_custom_call.1} parent=5 // pred_check_branch
        %207 = sbr.rel (%p205) target = $region32
      $region31: #{tpu_custom_call.1} parent=5 // pred_region
        // Predicated region
        $region33: #{tpu_custom_call.1} parent=31 // pred_check
          %p208 = pneg %p35
        $region34: #{tpu_custom_call.1} parent=31 // pred_check_branch
          %210 = sbr.rel (%p208) target = $region36
        $region35: #{tpu_custom_call.1} parent=31 // pred_region
          %s211 = smul.u32 4, %s15
          %p212 = scmp.lt.s32.totalorder %s211, 7
          %s213 = scalar_select %p212, %s211, 7
          %s214 = smul.addr %s213, 8
          %s215 = scalar_lea.vmem %s0, %s214
          %s216 = smul.u32 4, %s15
        $region36: #{tpu_custom_call.1} parent=31 // pred_fallthru
          _
        // Predicated region
        $region37: #{tpu_custom_call.1} parent=31 // pred_check
          %p217 = pneg %p61
        $region38: #{tpu_custom_call.1} parent=31 // pred_check_branch
          %219 = sbr.rel (%p217) target = $region40
        $region39: #{tpu_custom_call.1} parent=31 // pred_region
          %s220 = smul.u32 4, %s15
          %p221 = scmp.lt.s32.totalorder %s220, 7
          %s222 = scalar_select %p221, %s220, 7
          %s223 = smul.addr %s222, 8
          %s224 = scalar_lea.vmem %s1, %s223
          %s225 = smul.u32 4, %s15
        $region40: #{tpu_custom_call.1} parent=31 // pred_fallthru
          _
      $region32: #{tpu_custom_call.1} parent=5 // pred_fallthru
        _
      %p226 = scmp.le.s32.totalorder 1, %s15
      %p227 = scmp.lt.s32.totalorder %s15, 3
      %p228 = pnand %p226, %p227
      %p229 = pneg %p228
      // Predicated region
      $region41: #{tpu_custom_call.1} parent=5 // pred_check
        _
      $region42: #{tpu_custom_call.1} parent=5 // pred_check_branch
        %231 = sbr.rel (%p228) target = $region44
      $region43: #{tpu_custom_call.1} parent=5 // pred_region
        %s232 = ssub.s32 %s15, 1
        %s233 = smul.u32 4, %s20
        %p234 = scmp.lt.s32.totalorder %s233, 7
        %s235 = scalar_select %p234, %s233, 7
        %s236 = smul.addr %s235, 8
        %s237 = scalar_lea.vmem %s0, %s236
        %p238 = pneg %p41
        %p239 = pneg %p38
        %s240 = smul.u32 4, %s20
        %p241 = scmp.lt.s32.totalorder %s240, 7
        %s242 = scalar_select %p241, %s240, 7
        %s243 = smul.addr %s242, 8
        %s244 = scalar_lea.vmem %s1, %s243
        %p245 = pneg %p67
        %p246 = pneg %p64
        %p247 = pneg %p88
        %p248 = pneg %p85
        %p249 = pneg %p109
        %p250 = pneg %p106
        %p251 = pneg %p130
        %p252 = pneg %p127
        %p253 = pneg %p151
        %p254 = pneg %p148
        %p255 = pneg %p177
        %p256 = pneg %p174
        %s257 = sand.u32 %s164, 1
        %s258 = scalar_lea.sflag [#allocation3], %s257
        %s259 = sand.u32 %s164, 1
        %s260 = smul.addr %s259, 32
        %s261 = scalar_lea.vmem [#allocation2], %s260
        %s262 = smul.u32 4, %s20
        %p263 = scmp.lt.s32.totalorder %s262, 7
        %s264 = scalar_select %p263, %s262, 7
        %s265 = smul.addr %s264, 8
        %s266 = scalar_lea.vmem %s0, %s265
        %s267 = smul.u32 4, %s20
        %s268 = smul.u32 4, %s20
        %p269 = scmp.lt.s32.totalorder %s268, 7
        %s270 = scalar_select %p269, %s268, 7
        %s271 = smul.addr %s270, 8
        %s272 = scalar_lea.vmem %s1, %s271
        %s273 = smul.u32 4, %s20
        %s274 = smul.u32 4, %s20
        %v275 = vld [vmem:[%s266] sm:$0xff]
        %v276 = vld [vmem:[%s266 + $0x8] sm:$0xff]
        %v277 = vld [vmem:[%s266 + $0x10] sm:$0xff]
        %v278 = vld [vmem:[%s266 + $0x18] sm:$0xff]
        %v279 = vld [vmem:[%s272] sm:$0xff]
        %v280 = vld [vmem:[%s272 + $0x8] sm:$0xff]
        %v281 = vld [vmem:[%s272 + $0x10] sm:$0xff]
        %v282 = vld [vmem:[%s272 + $0x18] sm:$0xff]
        %v283 = vld [vmem:[%s2] sm:$0xff]
        %v284 = vld [vmem:[%s2 + $0x8] sm:$0xff]
        %v285 = vld [vmem:[%s2 + $0x10] sm:$0xff]
        %v286 = vld [vmem:[%s2 + $0x18] sm:$0xff]
        %v287 = vld [vmem:[%s2 + $0x20] sm:$0xff]
        %v288 = vld [vmem:[%s2 + $0x28] sm:$0xff]
        %v289 = vld [vmem:[%s2 + $0x30] sm:$0xff]
        %v290 = vld [vmem:[%s2 + $0x38] sm:$0xff]
        %vm291 = vcmask 261120
        %v293 = vsel %vm291, %v279, 0
        %v296 = vsel %vm291, %v280, 0
        %v299 = vsel %vm291, %v281, 0
        %v302 = vsel %vm291, %v282, 0
        %304 = vmatpush.msra.mxu0 0.0
        %305 = vmatpush.msra.mxu0 0.0
        %306 = vmatpush.msra.mxu0 0.0
        %307 = vmatpush.msra.mxu0 0.0
        %308 = vmatpush.msra.mxu0 0.0
        %309 = vmatpush.msra.mxu0 0.0
        %310 = vmatpush.msra.mxu0 0.0
        %311 = vmatpush.msra.mxu0 0.0
        %312 = vmatpush.msra.mxu0 0.0
        %313 = vmatpush.msra.mxu0 0.0
        %314 = vmatpush.msra.mxu0 0.0
        %315 = vmatpush.msra.mxu0 0.0
        %316 = vmatpush.msra.mxu0 %v290
        %317 = vmatpush.msra.mxu0 %v289
        %318 = vmatpush.msra.mxu0 %v288
        %319 = vmatpush.msra.mxu0 %v287
        %320 = vmatmul.f32.gmra.mxu0 %v293
        %v321 = vpop.f32.mrf.mxu0
        %v322 = vadd.f32 0.0, %v321
        %323 = vmatmul.f32.gmra.mxu0 %v296
        %v324 = vpop.f32.mrf.mxu0
        %v325 = vadd.f32 0.0, %v324
        %326 = vmatmul.f32.gmra.mxu0 %v299
        %v327 = vpop.f32.mrf.mxu0
        %v328 = vadd.f32 0.0, %v327
        %329 = vmatmul.f32.gmra.mxu0 %v302
        %v330 = vpop.f32.mrf.mxu0
        %v331 = vadd.f32 0.0, %v330
        %332 = vdwg.mxu0
        %v334 = vsel %vm291, %v275, 0
        %v337 = vsel %vm291, %v276, 0
        %v340 = vsel %vm291, %v277, 0
        %v343 = vsel %vm291, %v278, 0
        %345 = vmatpush.msra.mxu0 0.0
        %346 = vmatpush.msra.mxu0 0.0
        %347 = vmatpush.msra.mxu0 0.0
        %348 = vmatpush.msra.mxu0 0.0
        %349 = vmatpush.msra.mxu0 0.0
        %350 = vmatpush.msra.mxu0 0.0
        %351 = vmatpush.msra.mxu0 0.0
        %352 = vmatpush.msra.mxu0 0.0
        %353 = vmatpush.msra.mxu0 0.0
        %354 = vmatpush.msra.mxu0 0.0
        %355 = vmatpush.msra.mxu0 0.0
        %356 = vmatpush.msra.mxu0 0.0
        %357 = vmatpush.msra.mxu0 %v286
        %358 = vmatpush.msra.mxu0 %v285
        %359 = vmatpush.msra.mxu0 %v284
        %360 = vmatpush.msra.mxu0 %v283
        %361 = vmatmul.f32.gmra.mxu0 %v334
        %v362 = vpop.f32.mrf.mxu0
        %v363 = vadd.f32 %v322, %v362
        %364 = vmatmul.f32.gmra.mxu0 %v337
        %v365 = vpop.f32.mrf.mxu0
        %v366 = vadd.f32 %v325, %v365
        %367 = vmatmul.f32.gmra.mxu0 %v340
        %v368 = vpop.f32.mrf.mxu0
        %v369 = vadd.f32 %v328, %v368
        %370 = vmatmul.f32.gmra.mxu0 %v343
        %v371 = vpop.f32.mrf.mxu0
        %v372 = vadd.f32 %v331, %v371
        %373 = vdwg.mxu0
        %v374 = vld [vmem:[%s3] sm:$0x1]
        %v376 = vperm.slane %v374, 0
        %v378 = vadd.f32 %v363, %v376
        %v379 = vadd.f32 %v366, %v376
        %v380 = vadd.f32 %v369, %v376
        %v381 = vadd.f32 %v372, %v376
        %v382 = vmax.f32 %v378, 0.0
        %v383 = vmax.f32 %v379, 0.0
        %v384 = vmax.f32 %v380, 0.0
        %v385 = vmax.f32 %v381, 0.0
        %v386 = vld [vmem:[%s4] sm:$0xff]
        %v387 = vld [vmem:[%s4 + $0x8] sm:$0xff]
        %v388 = vld [vmem:[%s4 + $0x10] sm:$0xff]
        %v389 = vld [vmem:[%s4 + $0x18] sm:$0xff]
        %v390 = vld [vmem:[%s5] sm:$0x1]
        %v392 = vperm.slane %v390, 0
        %v395 = vsel %vm291, %v382, 0
        %v398 = vsel %vm291, %v383, 0
        %v401 = vsel %vm291, %v384, 0
        %v404 = vsel %vm291, %v385, 0
        %406 = vmatpush.msra.mxu0 0.0
        %407 = vmatpush.msra.mxu0 0.0
        %408 = vmatpush.msra.mxu0 0.0
        %409 = vmatpush.msra.mxu0 0.0
        %410 = vmatpush.msra.mxu0 0.0
        %411 = vmatpush.msra.mxu0 0.0
        %412 = vmatpush.msra.mxu0 0.0
        %413 = vmatpush.msra.mxu0 0.0
        %414 = vmatpush.msra.mxu0 0.0
        %415 = vmatpush.msra.mxu0 0.0
        %416 = vmatpush.msra.mxu0 0.0
        %417 = vmatpush.msra.mxu0 0.0
        %418 = vmatpush.msra.mxu0 %v389
        %419 = vmatpush.msra.mxu0 %v388
        %420 = vmatpush.msra.mxu0 %v387
        %421 = vmatpush.msra.mxu0 %v386
        %422 = vmatmul.f32.gmra.mxu0 %v395
        %v423 = vpop.f32.mrf.mxu0
        %v424 = vadd.f32 %v392, %v423
        %425 = vmatmul.f32.gmra.mxu0 %v398
        %v426 = vpop.f32.mrf.mxu0
        %v427 = vadd.f32 %v392, %v426
        %428 = vmatmul.f32.gmra.mxu0 %v401
        %v429 = vpop.f32.mrf.mxu0
        %v430 = vadd.f32 %v392, %v429
        %431 = vmatmul.f32.gmra.mxu0 %v404
        %v432 = vpop.f32.mrf.mxu0
        %v433 = vadd.f32 %v392, %v432
        %434 = vdwg.mxu0
        %435 = vst [vmem:[%s261] sm:$0xff] %v424
        %436 = vst [vmem:[%s261 + $0x8] sm:$0xff] %v427
        %437 = vst [vmem:[%s261 + $0x10] sm:$0xff] %v430
        %438 = vst [vmem:[%s261 + $0x18] sm:$0xff] %v433
        %s439 = sand.u32 %s164, 1
        %s440 = scalar_lea.sflag [#allocation3], %s439
        %s441 = sand.u32 %s164, 1
        %s442 = smul.addr %s441, 32
        %s443 = scalar_lea.vmem [#allocation2], %s442
        // Predicated region
        $region45: #{tpu_custom_call.1} parent=43 // pred_check
          %p444 = pneg %p174
        $region46: #{tpu_custom_call.1} parent=43 // pred_check_branch
          %446 = sbr.rel (%p444) target = $region48
        $region47: #{tpu_custom_call.1} parent=43 // pred_region
          %s447 = smul.u32 4, %s20
          %449 = vsyncadd %s440, 0
          %s450 = smul.addr %s447, 8
          %s451 = scalar_lea.hbm %s6, %s450
          %s452 = sshll.u32 %s443, 4
          %s453 = int_to_ptr.vmem [resolvable:$true] %s452
          %s454 = sshll.u32 %s451, 4
          %s455 = int_to_ptr.hbm [resolvable:$true] %s454
          %460 = dma.vmem_to_hbm [thread:$0]  %s453, 512, %s455, %s440, 128, 128, 8
        $region48: #{tpu_custom_call.1} parent=43 // pred_fallthru
          _
      $region44: #{tpu_custom_call.1} parent=5 // pred_fallthru
        _
      %p461 = scmp.le.s32.totalorder 2, %s15
      // Predicated region
      $region49: #{tpu_custom_call.1} parent=5 // pred_check
        %p462 = pneg %p461
      $region50: #{tpu_custom_call.1} parent=5 // pred_check_branch
        %464 = sbr.rel (%p462) target = $region52
      $region51: #{tpu_custom_call.1} parent=5 // pred_region
        %s465 = ssub.s32 %s15, 2
        // Predicated region
        $region53: #{tpu_custom_call.1} parent=51 // pred_check
          %p466 = pneg %p180
        $region54: #{tpu_custom_call.1} parent=51 // pred_check_branch
          %468 = sbr.rel (%p466) target = $region56
        $region55: #{tpu_custom_call.1} parent=51 // pred_region
          %s469 = sand.u32 %s165, 1
          %s470 = scalar_lea.sflag [#allocation3], %s469
          %s471 = sand.u32 %s165, 1
          %s472 = smul.addr %s471, 32
          %s473 = scalar_lea.vmem [#allocation2], %s472
          %475 = dma.done %s470, 512
        $region56: #{tpu_custom_call.1} parent=51 // pred_fallthru
          _
      $region52: #{tpu_custom_call.1} parent=5 // pred_fallthru
        _
    $region6: #{tpu_custom_call.1} parent=1 // loop_footer
      %s19 = sadd.s32 1, %s15
    $region7: #{tpu_custom_call.1} parent=1 // loop_footer_branch
      %14 = sbr.rel target = $region3
    $region8: #{tpu_custom_call.1} parent=1 // loop_exit
      _
    %476 = vsyncpa [#allocation3], 1
    %s477 = scalar_lea.sflag [#allocation3], 1
    %478 = vsyncpa %s477, 1

</llo_original>
